<compile_context>
chip_gen: v7x
topology: tpu7x:2x2x1
jax: 0.10.0
libtpu: 0.0.40
codegen_flags: <defaults>
</compile_context>

<pallas_src>
import math

import jax
import jax.numpy as jnp
from jax.experimental import pallas as pl
from jax.experimental.pallas import tpu as pltpu


# --------------------------------------------------------------------------
# In-kernel helpers (f32 vector math)
# --------------------------------------------------------------------------
def _layer_norm(x, w, b, eps=1e-6):
    # PyTorch nn.LayerNorm semantics (module uses eps=1e-6): biased variance.
    mean = jnp.mean(x, axis=-1, keepdims=True)
    var = jnp.mean((x - mean) ** 2, axis=-1, keepdims=True)
    return (x - mean) * jax.lax.rsqrt(var + eps) * w + b


def _softmax_last(a):
    a = a - jnp.max(a, axis=-1, keepdims=True)
    e = jnp.exp(a)
    # Reciprocal on the EUP slot instead of a VPU divide.
    return e * pl.reciprocal(jnp.sum(e, axis=-1, keepdims=True), approx=True)


# --------------------------------------------------------------------------
# Kernels
# --------------------------------------------------------------------------
def _make_kernel(pre_norm: bool, num_heads: int, head_dim: int, mm_dtype):
    if pre_norm:
        def kernel(x_ref, lnq_w_ref, lnq_b_ref, wqkv_ref, bqkv_ref,
                   wo_ref, bo_ref, lnm_w_ref, lnm_b_ref,
                   w1_ref, b1_ref, w2_ref, b2_ref, out_ref):
            blk_b, blk_l, d = x_ref.shape
            rows = blk_b * blk_l
            q_size = wqkv_ref.shape[1] // 3

            x = x_ref[...].reshape(rows, d)                       # (R, D) f32
            xn = _layer_norm(x, lnq_w_ref[...], lnq_b_ref[...])

            # Fused QKV projection: one (R, D) @ (D, 3*qkv) matmul.  The
            # 1/sqrt(head_dim) attention scale is pre-folded into the Q
            # columns of wqkv/bqkv by prepare_params (no per-step multiply).
            qkv = jnp.dot(xn.astype(mm_dtype), wqkv_ref[...],
                          preferred_element_type=jnp.float32) + bqkv_ref[...]
            qkv = qkv.reshape(blk_b, blk_l, 3 * q_size).astype(mm_dtype)

            # Per-head attention, batched over the Bblk batch dim with 3-D
            # einsums; the Python loop is unrolled at trace time (num_heads
            # is small and static).  Head outputs stay in registers and are
            # written once as a lane-dense (R, qkv) slab -- no VMEM scratch,
            # no masked partial stores, no read-back.
            heads = []
            for h in range(num_heads):
                lo = h * head_dim
                hi = lo + head_dim
                q_h = qkv[:, :, lo:hi]
                k_h = qkv[:, :, q_size + lo:q_size + hi]
                v_h = qkv[:, :, 2 * q_size + lo:2 * q_size + hi]
                s = jnp.einsum('bqd,bkd->bqk', q_h, k_h,
                               preferred_element_type=jnp.float32)
                p = _softmax_last(s)
                heads.append(jnp.einsum('bqk,bkd->bqd', p.astype(mm_dtype),
                                        v_h,
                                        preferred_element_type=jnp.float32))
            upd = jnp.concatenate(heads, axis=-1).reshape(rows, q_size)

            # Output projection (single (R, qkv) @ (qkv, D) matmul) + residual.
            o = jnp.dot(upd.astype(mm_dtype), wo_ref[...],
                        preferred_element_type=jnp.float32) + bo_ref[...]
            x2 = o + x                                            # residual 1

            z = _layer_norm(x2, lnm_w_ref[...], lnm_b_ref[...])
            hdn = jnp.maximum(
                jnp.dot(z.astype(mm_dtype), w1_ref[...],
                        preferred_element_type=jnp.float32) + b1_ref[...], 0.0)
            z = jnp.dot(hdn.astype(mm_dtype), w2_ref[...],
                        preferred_element_type=jnp.float32) + b2_ref[...]
            out_ref[...] = (z + x2).reshape(blk_b, blk_l, d).astype(out_ref.dtype)
        return kernel

    else:
        def kernel(x_ref, lnm_w_ref, lnm_b_ref,
                   w1_ref, b1_ref, w2_ref, b2_ref, out_ref):
            x = x_ref[...]                                         # (TM, D) f32
            hdn = jnp.maximum(
                jnp.dot(x.astype(mm_dtype), w1_ref[...],
                        preferred_element_type=jnp.float32) + b1_ref[...], 0.0)
            z = jnp.dot(hdn.astype(mm_dtype), w2_ref[...],
                        preferred_element_type=jnp.float32) + b2_ref[...]
            z = z + x
            out_ref[...] = _layer_norm(z, lnm_w_ref[...], lnm_b_ref[...]
                                       ).astype(out_ref.dtype)
        return kernel


# --------------------------------------------------------------------------
# Generation-aware VMEM limit & tiling heuristics
# --------------------------------------------------------------------------
def _pick_vmem_limit():
    """~100 MiB on 128-MiB-VMEM chips (v5e/v6e), <=48 MiB on v7x (64 MiB/TC),
    conservative 32 MiB if the query is unavailable."""
    try:
        info = pltpu.get_tpu_info()
        cap = int(getattr(info, "vmem_capacity_bytes", 0) or 0)
    except Exception:
        cap = 0
    if cap >= 128 * 1024 * 1024:
        return 100 * 1024 * 1024
    if cap > 0:
        return min(48 * 1024 * 1024, (cap * 3) // 4)
    return 32 * 1024 * 1024


def _pick_row_tile(total_rows, max_tile=1024, min_split_rows=256):
    """Row tile for the post-norm (rows, D) path.  Single full-extent block
    unless splitting still leaves every grid step >= min_split_rows rows;
    then the largest multiple-of-8 divisor <= max_tile."""
    if total_rows <= max_tile or total_rows % 8 != 0:
        return total_rows
    divisors = [t for t in range(8, max_tile + 1, 8) if total_rows % t == 0]
    big = [t for t in divisors if t >= min_split_rows]
    if big:
        return max(big)
    return max(divisors) if divisors else total_rows


def _pick_batch_block(batch, seq_len, target_rows=512, min_split_rows=256):
    """Batches per grid step for the pre-norm path (rows per step = bblk*L).
    Never shrinks matmul M below min_split_rows just to create grid steps."""
    total_rows = batch * seq_len
    if total_rows <= target_rows:
        return batch
    desired = max(1, target_rows // max(seq_len, 1))
    divisors = [d for d in range(1, batch + 1) if batch % d == 0]
    ok = [d for d in divisors if d <= desired and d * seq_len >= min_split_rows]
    if ok:
        return max(ok)
    fits = [d for d in divisors if d <= desired]
    return max(fits) if fits else batch


# --------------------------------------------------------------------------
# One-time parameter preparation (hoisted out of the hot path; cache this)
# --------------------------------------------------------------------------
def prepare_params(params, *, num_heads, head_dim, matmul_dtype=jnp.bfloat16):
    """Concatenate QKV weights, fold the 1/sqrt(head_dim) attention scale into
    the Q projection, and cast matmul operands to `matmul_dtype` ONCE."""
    scale = 1.0 / math.sqrt(head_dim)
    wq = params["wq"] * scale
    bq = params["bq"] * scale
    wqkv = jnp.concatenate([wq, params["wk"], params["wv"]],
                           axis=1).astype(matmul_dtype)
    bqkv = jnp.concatenate([bq, params["bk"], params["bv"]], axis=1)  # f32
    return dict(
        wqkv=wqkv, bqkv=bqkv,
        wo=params["wo"].astype(matmul_dtype), bo=params["bo"],
        w1=params["w1"].astype(matmul_dtype), b1=params["b1"],
        w2=params["w2"].astype(matmul_dtype), b2=params["b2"],
        ln_q_w=params["ln_q_w"], ln_q_b=params["ln_q_b"],
        ln_m_w=params["ln_m_w"], ln_m_b=params["ln_m_b"],
    )


# --------------------------------------------------------------------------
# Wrapper
# --------------------------------------------------------------------------
def transformer_block(x, prep, *, pre_norm: bool, num_heads: int):
    B, L, D = x.shape
    x = x.astype(jnp.float32)
    head_dim = D // num_heads                 # matches PyTorch forward
    mm_dtype = prep["w1"].dtype
    qkv_size = prep["wqkv"].shape[1] // 3
    mlp_size = prep["w1"].shape[1]
    assert qkv_size == num_heads * head_dim, (
        "qkv_size must equal num_heads * (embed_dim // num_heads) for the "
        "PyTorch .view() in the forward to be valid")

    compiler_params = pltpu.CompilerParams(
        dimension_semantics=("parallel",),
        vmem_limit_bytes=_pick_vmem_limit(),
    )

    def weight_spec(a, single_buffer):
        nd = len(a.shape)
        idx = lambda i: (0,) * nd
        if single_buffer:
            # Constant-index weights: single-buffer them so they don't pay a
            # double-buffered VMEM footprint (main VMEM headroom lever).
            return pl.BlockSpec(a.shape, idx, pipeline_mode=pl.Buffered(1))
        return pl.BlockSpec(a.shape, idx)

    def weight_bytes(args):
        return sum(int(a.size) * a.dtype.itemsize for a in args)

    if not pre_norm:
        # MLP -> +residual -> LayerNorm.  Collapse (B, L) into rows and tile
        # rows densely (lane-dense D=128 output stores).
        rows = B * L
        x2d = x.reshape(rows, D)
        tm = _pick_row_tile(rows)
        weight_args = (prep["ln_m_w"], prep["ln_m_b"],
                       prep["w1"], prep["b1"], prep["w2"], prep["b2"])
        kernel = _make_kernel(False, num_heads, head_dim, mm_dtype)
        cost = pl.CostEstimate(
            flops=int(4 * rows * D * mlp_size),
            transcendentals=int(rows),
            bytes_accessed=int(2 * rows * D * 4 + weight_bytes(weight_args)))

        def build(single_buffer):
            return pl.pallas_call(
                kernel,
                out_shape=jax.ShapeDtypeStruct((rows, D), jnp.float32),
                grid_spec=pltpu.PrefetchScalarGridSpec(
                    num_scalar_prefetch=0,
                    grid=(rows // tm,),
                    in_specs=[pl.BlockSpec((tm, D), lambda i: (i, 0))]
                             + [weight_spec(a, single_buffer)
                                for a in weight_args],
                    out_specs=pl.BlockSpec((tm, D), lambda i: (i, 0)),
                ),
                compiler_params=compiler_params,
                cost_estimate=cost,
            )

        try:
            out = build(True)(x2d, *weight_args)
        except Exception:
            out = build(False)(x2d, *weight_args)   # fallback: default buffering
        return out.reshape(B, L, D)

    # pre_norm=True: LN -> MHSA -> +res -> LN -> MLP -> +res
    # TODO(synk): num_heads == 1 pre_norm path (no dense_o, squeeze(-2)) not
    # implemented; module default is num_heads=4 (multi_head=True).
    assert num_heads > 1, "pre_norm kernel implements the multi_head path"
    bblk = _pick_batch_block(B, L)
    weight_args = (prep["ln_q_w"], prep["ln_q_b"], prep["wqkv"], prep["bqkv"],
                   prep["wo"], prep["bo"], prep["ln_m_w"], prep["ln_m_b"],
                   prep["w1"], prep["b1"], prep["w2"], prep["b2"])
    kernel = _make_kernel(True, num_heads, head_dim, mm_dtype)
    cost = pl.CostEstimate(
        flops=int(2 * B * L * (3 * D * qkv_size + qkv_size * D
                               + 2 * D * mlp_size)
                  + 4 * B * num_heads * L * L * head_dim),
        transcendentals=int(B * num_heads * L * L + 2 * B * L),
        bytes_accessed=int(2 * B * L * D * 4 + weight_bytes(weight_args)))

    def build(single_buffer):
        return pl.pallas_call(
            kernel,
            out_shape=jax.ShapeDtypeStruct((B, L, D), jnp.float32),
            grid_spec=pltpu.PrefetchScalarGridSpec(
                num_scalar_prefetch=0,
                grid=(B // bblk,),
                in_specs=[pl.BlockSpec((bblk, L, D), lambda b: (b, 0, 0))]
                         + [weight_spec(a, single_buffer)
                            for a in weight_args],
                out_specs=pl.BlockSpec((bblk, L, D), lambda b: (b, 0, 0)),
            ),
            compiler_params=compiler_params,
            cost_estimate=cost,
        )

    try:
        return build(True)(x, *weight_args)
    except Exception:
        return build(False)(x, *weight_args)       # fallback: default buffering


# --------------------------------------------------------------------------
# Deterministic parameter init (synthetic; matches module shapes)
# --------------------------------------------------------------------------
def init_params(key, embed_dim, qkv_size, mlp_size):
    def xavier(k, fan_in, fan_out):
        lim = math.sqrt(6.0 / (fan_in + fan_out))
        return jax.random.uniform(k, (fan_in, fan_out), jnp.float32, -lim, lim)

    ks = jax.random.split(key, 12)
    f32 = jnp.float32
    return dict(
        wq=xavier(ks[0], embed_dim, qkv_size),
        bq=0.01 * jax.random.normal(ks[1], (1, qkv_size), f32),
        wk=xavier(ks[2], embed_dim, qkv_size),
        bk=0.01 * jax.random.normal(ks[3], (1, qkv_size), f32),
        wv=xavier(ks[4], embed_dim, qkv_size),
        bv=0.01 * jax.random.normal(ks[5], (1, qkv_size), f32),
        wo=xavier(ks[6], qkv_size, embed_dim),
        bo=0.01 * jax.random.normal(ks[7], (1, embed_dim), f32),
        ln_q_w=jnp.ones((1, embed_dim), f32)
               + 0.05 * jax.random.normal(ks[8], (1, embed_dim), f32),
        ln_q_b=0.05 * jax.random.normal(ks[9], (1, embed_dim), f32),
        ln_m_w=jnp.ones((1, embed_dim), f32)
               + 0.05 * jax.random.normal(ks[10], (1, embed_dim), f32),
        ln_m_b=0.05 * jax.random.normal(ks[11], (1, embed_dim), f32),
        w1=xavier(jax.random.fold_in(key, 100), embed_dim, mlp_size),
        b1=0.01 * jax.random.normal(jax.random.fold_in(key, 101),
                                    (1, mlp_size), f32),
        w2=xavier(jax.random.fold_in(key, 102), mlp_size, embed_dim),
        b2=0.01 * jax.random.normal(jax.random.fold_in(key, 103),
                                    (1, embed_dim), f32),
    )


# --------------------------------------------------------------------------
# Pure-JAX reference (mirrors PyTorch semantics exactly, all f32)
# --------------------------------------------------------------------------
def reference(x, p, *, pre_norm, num_heads):
    B, L, D = x.shape
    head_dim = D // num_heads

    def ln(t, w, b):
        m = jnp.mean(t, axis=-1, keepdims=True)
        v = jnp.mean((t - m) ** 2, axis=-1, keepdims=True)
        return (t - m) / jnp.sqrt(v + 1e-6) * w + b

    def mlp(t):
        h = jnp.maximum(t @ p["w1"] + p["b1"], 0.0)
        return h @ p["w2"] + p["b2"]

    if not pre_norm:
        z = mlp(x) + x
        return ln(z, p["ln_m_w"], p["ln_m_b"])

    xn = ln(x, p["ln_q_w"], p["ln_q_b"])
    q = (xn @ p["wq"] + p["bq"]).reshape(B, L, num_heads, head_dim)
    k = (xn @ p["wk"] + p["bk"]).reshape(B, L, num_heads, head_dim)
    v = (xn @ p["wv"] + p["bv"]).reshape(B, L, num_heads, head_dim)
    q = q / math.sqrt(head_dim)
    attn = jnp.einsum("bqhd,bkhd->bhqk", q, k)
    attn = jax.nn.softmax(attn, axis=-1)
    upd = jnp.einsum("bhqk,bkhd->bqhd", attn, v).reshape(B, L, -1)
    o = upd @ p["wo"] + p["bo"]
    x2 = o + x
    z = ln(x2, p["ln_m_w"], p["ln_m_b"])
    z = mlp(z)
    return z + x2


# --------------------------------------------------------------------------
if __name__ == "__main__":
    B, L = 4, 8
    embed_dim, num_heads, qkv_size, mlp_size = 128, 4, 128, 256
    head_dim = embed_dim // num_heads

    key = jax.random.PRNGKey(0)
    kx, kp = jax.random.split(key)
    x = jax.random.normal(kx, (B, L, embed_dim), jnp.float32)
    params = init_params(kp, embed_dim, qkv_size, mlp_size)

    ok = True
    for pre_norm in (False, True):            # False is the module default
        ref = reference(x, params, pre_norm=pre_norm, num_heads=num_heads)
        # bf16 MXU operands (default fast path) and f32 MXU operands
        # (tighter-accuracy fallback); accumulation / LN / softmax always f32.
        for mm_dtype, tol in ((jnp.bfloat16, 5e-2), (jnp.float32, 5e-3)):
            prep = prepare_params(params, num_heads=num_heads,
                                  head_dim=head_dim, matmul_dtype=mm_dtype)
            out = transformer_block(x, prep, pre_norm=pre_norm,
                                    num_heads=num_heads)
            out = jax.block_until_ready(out)
            if not jnp.allclose(out, ref, atol=tol, rtol=tol):
                ok = False
                print(f"MISMATCH pre_norm={pre_norm} "
                      f"mm={jnp.dtype(mm_dtype).name}: "
                      f"max_err={float(jnp.max(jnp.abs(out - ref)))}")

    if ok:
        print("KERNEL_OK")
</pallas_src>

<mosaic_0001>
module attributes {stable_mosaic.version = 11 : i64} {
  func.func @kernel(%arg0: i32, %arg1: memref<32x128xf32, #tpu.memory_space<vmem>>, %arg2: memref<1x128xf32, #tpu.memory_space<vmem>>, %arg3: memref<1x128xf32, #tpu.memory_space<vmem>>, %arg4: memref<128x256xbf16, #tpu.memory_space<vmem>>, %arg5: memref<1x256xf32, #tpu.memory_space<vmem>>, %arg6: memref<256x128xbf16, #tpu.memory_space<vmem>>, %arg7: memref<1x128xf32, #tpu.memory_space<vmem>>, %arg8: memref<32x128xf32, #tpu.memory_space<vmem>>) attributes {dimension_semantics = [#tpu.dimension_semantics<parallel>], iteration_bounds = array<i64: 1>, scalar_prefetch = 0 : i64, scratch_operands = 0 : i64, tpu.core_type = #tpu.core_type<tc>, window_params = [{transform_indices = @transform_0, window_bounds = array<i64: 32, 128>}, {pipeline_mode = #tpu.pipeline_mode<synchronous>, transform_indices = @transform_1, window_bounds = array<i64: 1, 128>}, {pipeline_mode = #tpu.pipeline_mode<synchronous>, transform_indices = @transform_2, window_bounds = array<i64: 1, 128>}, {pipeline_mode = #tpu.pipeline_mode<synchronous>, transform_indices = @transform_3, window_bounds = array<i64: 128, 256>}, {pipeline_mode = #tpu.pipeline_mode<synchronous>, transform_indices = @transform_4, window_bounds = array<i64: 1, 256>}, {pipeline_mode = #tpu.pipeline_mode<synchronous>, transform_indices = @transform_5, window_bounds = array<i64: 256, 128>}, {pipeline_mode = #tpu.pipeline_mode<synchronous>, transform_indices = @transform_6, window_bounds = array<i64: 1, 128>}, {transform_indices = @transform_7, window_bounds = array<i64: 32, 128>}]} {
    %c0 = arith.constant 0 : index
    %c0_0 = arith.constant 0 : index
    %0 = vector.load %arg1[%c0, %c0_0] : memref<32x128xf32, #tpu.memory_space<vmem>>, vector<32x128xf32>
    %1 = arith.truncf %0 : vector<32x128xf32> to vector<32x128xbf16>
    %c0_1 = arith.constant 0 : index
    %c0_2 = arith.constant 0 : index
    %2 = vector.load %arg4[%c0_1, %c0_2] : memref<128x256xbf16, #tpu.memory_space<vmem>>, vector<128x256xbf16>
    %cst = arith.constant dense<0.000000e+00> : vector<32x256xf32>
    %3 = tpu.matmul %1, %2, %cst {dimension_numbers = #tpu.dot_dimension_numbers<[1], [0], [0], [1], [0, 0, 1, 1], [], []>} : vector<32x128xbf16>, vector<128x256xbf16>, vector<32x256xf32> -> vector<32x256xf32>
    %c0_3 = arith.constant 0 : index
    %c0_4 = arith.constant 0 : index
    %4 = vector.load %arg5[%c0_3, %c0_4] : memref<1x256xf32, #tpu.memory_space<vmem>>, vector<1x256xf32>
    %5 = vector.broadcast %4 : vector<1x256xf32> to vector<32x256xf32>
    %6 = arith.addf %3, %5 : vector<32x256xf32>
    %cst_5 = arith.constant 0.000000e+00 : f32
    %7 = vector.broadcast %cst_5 : f32 to vector<32x256xf32>
    %8 = arith.maximumf %6, %7 : vector<32x256xf32>
    %9 = arith.truncf %8 : vector<32x256xf32> to vector<32x256xbf16>
    %c0_6 = arith.constant 0 : index
    %c0_7 = arith.constant 0 : index
    %10 = vector.load %arg6[%c0_6, %c0_7] : memref<256x128xbf16, #tpu.memory_space<vmem>>, vector<256x128xbf16>
    %cst_8 = arith.constant dense<0.000000e+00> : vector<32x128xf32>
    %11 = tpu.matmul %9, %10, %cst_8 {dimension_numbers = #tpu.dot_dimension_numbers<[1], [0], [0], [1], [0, 0, 1, 1], [], []>} : vector<32x256xbf16>, vector<256x128xbf16>, vector<32x128xf32> -> vector<32x128xf32>
    %c0_9 = arith.constant 0 : index
    %c0_10 = arith.constant 0 : index
    %12 = vector.load %arg7[%c0_9, %c0_10] : memref<1x128xf32, #tpu.memory_space<vmem>>, vector<1x128xf32>
    %13 = vector.broadcast %12 : vector<1x128xf32> to vector<32x128xf32>
    %14 = arith.addf %11, %13 : vector<32x128xf32>
    %15 = arith.addf %14, %0 : vector<32x128xf32>
    %c0_11 = arith.constant 0 : index
    %c0_12 = arith.constant 0 : index
    %16 = vector.load %arg2[%c0_11, %c0_12] : memref<1x128xf32, #tpu.memory_space<vmem>>, vector<1x128xf32>
    %c0_13 = arith.constant 0 : index
    %c0_14 = arith.constant 0 : index
    %17 = vector.load %arg3[%c0_13, %c0_14] : memref<1x128xf32, #tpu.memory_space<vmem>>, vector<1x128xf32>
    %cst_15 = arith.constant dense<0.000000e+00> : vector<32xf32>
    %18 = vector.multi_reduction <add>, %15, %cst_15 [1] : vector<32x128xf32> to vector<32xf32>
    %19 = vector.shape_cast %18 : vector<32xf32> to vector<32x1xf32>
    %cst_16 = arith.constant 1.280000e+02 : f32
    %20 = vector.broadcast %cst_16 : f32 to vector<32x1xf32>
    %21 = arith.divf %19, %20 : vector<32x1xf32>
    %22 = vector.broadcast %21 : vector<32x1xf32> to vector<32x128xf32>
    %23 = arith.subf %15, %22 : vector<32x128xf32>
    %24 = arith.mulf %23, %23 : vector<32x128xf32>
    %cst_17 = arith.constant dense<0.000000e+00> : vector<32xf32>
    %25 = vector.multi_reduction <add>, %24, %cst_17 [1] : vector<32x128xf32> to vector<32xf32>
    %26 = vector.shape_cast %25 : vector<32xf32> to vector<32x1xf32>
    %cst_18 = arith.constant 1.280000e+02 : f32
    %27 = vector.broadcast %cst_18 : f32 to vector<32x1xf32>
    %28 = arith.divf %26, %27 : vector<32x1xf32>
    %29 = vector.broadcast %21 : vector<32x1xf32> to vector<32x128xf32>
    %30 = arith.subf %15, %29 : vector<32x128xf32>
    %cst_19 = arith.constant 9.99999997E-7 : f32
    %31 = vector.broadcast %cst_19 : f32 to vector<32x1xf32>
    %32 = arith.addf %28, %31 : vector<32x1xf32>
    %33 = math.rsqrt %32 : vector<32x1xf32>
    %34 = vector.broadcast %33 : vector<32x1xf32> to vector<32x128xf32>
    %35 = arith.mulf %30, %34 : vector<32x128xf32>
    %36 = vector.broadcast %16 : vector<1x128xf32> to vector<32x128xf32>
    %37 = arith.mulf %35, %36 : vector<32x128xf32>
    %38 = vector.broadcast %17 : vector<1x128xf32> to vector<32x128xf32>
    %39 = arith.addf %37, %38 : vector<32x128xf32>
    %c0_20 = arith.constant 0 : index
    %c0_21 = arith.constant 0 : index
    %40 = vector.load %arg8[%c0_20, %c0_21] : memref<32x128xf32, #tpu.memory_space<vmem>>, vector<32x128xf32>
    tpu.vector_store %arg8[%c0_20, %c0_21], %39 {strides = array<i32>} : memref<32x128xf32, #tpu.memory_space<vmem>>, vector<32x128xf32>,
    return
  }
  func.func @transform_0(%arg0: i32) -> (i32, i32) {
    %c0_i32 = arith.constant 0 : i32
    %c0_i32_0 = arith.constant 0 : i32
    return %arg0, %c0_i32 : i32, i32
  }
  func.func @transform_1(%arg0: i32) -> (i32, i32) {
    %c0_i32 = arith.constant 0 : i32
    %c0_i32_0 = arith.constant 0 : i32
    %c0_i32_1 = arith.constant 0 : i32
    return %c0_i32, %c0_i32_0 : i32, i32
  }
  func.func @transform_2(%arg0: i32) -> (i32, i32) {
    %c0_i32 = arith.constant 0 : i32
    %c0_i32_0 = arith.constant 0 : i32
    %c0_i32_1 = arith.constant 0 : i32
    return %c0_i32, %c0_i32_0 : i32, i32
  }
  func.func @transform_3(%arg0: i32) -> (i32, i32) {
    %c0_i32 = arith.constant 0 : i32
    %c0_i32_0 = arith.constant 0 : i32
    %c0_i32_1 = arith.constant 0 : i32
    return %c0_i32, %c0_i32_0 : i32, i32
  }
  func.func @transform_4(%arg0: i32) -> (i32, i32) {
    %c0_i32 = arith.constant 0 : i32
    %c0_i32_0 = arith.constant 0 : i32
    %c0_i32_1 = arith.constant 0 : i32
    return %c0_i32, %c0_i32_0 : i32, i32
  }
  func.func @transform_5(%arg0: i32) -> (i32, i32) {
    %c0_i32 = arith.constant 0 : i32
    %c0_i32_0 = arith.constant 0 : i32
    %c0_i32_1 = arith.constant 0 : i32
    return %c0_i32, %c0_i32_0 : i32, i32
  }
  func.func @transform_6(%arg0: i32) -> (i32, i32) {
    %c0_i32 = arith.constant 0 : i32
    %c0_i32_0 = arith.constant 0 : i32
    %c0_i32_1 = arith.constant 0 : i32
    return %c0_i32, %c0_i32_0 : i32, i32
  }
  func.func @transform_7(%arg0: i32) -> (i32, i32) {
    %c0_i32 = arith.constant 0 : i32
    %c0_i32_0 = arith.constant 0 : i32
    return %arg0, %c0_i32 : i32, i32
  }
}

module attributes {stable_mosaic.version = 11 : i64} {
  func.func @kernel(%arg0: i32, %arg1: memref<32x128xf32, #tpu.memory_space<vmem>>, %arg2: memref<1x128xf32, #tpu.memory_space<vmem>>, %arg3: memref<1x128xf32, #tpu.memory_space<vmem>>, %arg4: memref<128x256xbf16, #tpu.memory_space<vmem>>, %arg5: memref<1x256xf32, #tpu.memory_space<vmem>>, %arg6: memref<256x128xbf16, #tpu.memory_space<vmem>>, %arg7: memref<1x128xf32, #tpu.memory_space<vmem>>, %arg8: memref<32x128xf32, #tpu.memory_space<vmem>>) attributes {dimension_semantics = [#tpu.dimension_semantics<parallel>], iteration_bounds = array<i64: 1>, scalar_prefetch = 0 : i64, scratch_operands = 0 : i64, tpu.core_type = #tpu.core_type<tc>, window_params = [{transform_indices = @transform_0, window_bounds = array<i64: 32, 128>}, {pipeline_mode = #tpu.pipeline_mode<synchronous>, transform_indices = @transform_1, window_bounds = array<i64: 1, 128>}, {pipeline_mode = #tpu.pipeline_mode<synchronous>, transform_indices = @transform_2, window_bounds = array<i64: 1, 128>}, {pipeline_mode = #tpu.pipeline_mode<synchronous>, transform_indices = @transform_3, window_bounds = array<i64: 128, 256>}, {pipeline_mode = #tpu.pipeline_mode<synchronous>, transform_indices = @transform_4, window_bounds = array<i64: 1, 256>}, {pipeline_mode = #tpu.pipeline_mode<synchronous>, transform_indices = @transform_5, window_bounds = array<i64: 256, 128>}, {pipeline_mode = #tpu.pipeline_mode<synchronous>, transform_indices = @transform_6, window_bounds = array<i64: 1, 128>}, {transform_indices = @transform_7, window_bounds = array<i64: 32, 128>}]} {
    %c0 = arith.constant 0 : index
    %c0_0 = arith.constant 0 : index
    %0 = vector.load %arg1[%c0, %c0_0] : memref<32x128xf32, #tpu.memory_space<vmem>>, vector<32x128xf32>
    %1 = arith.truncf %0 : vector<32x128xf32> to vector<32x128xbf16>
    %c0_1 = arith.constant 0 : index
    %c0_2 = arith.constant 0 : index
    %2 = vector.load %arg4[%c0_1, %c0_2] : memref<128x256xbf16, #tpu.memory_space<vmem>>, vector<128x256xbf16>
    %cst = arith.constant dense<0.000000e+00> : vector<32x256xf32>
    %3 = tpu.matmul %1, %2, %cst {dimension_numbers = #tpu.dot_dimension_numbers<[1], [0], [0], [1], [0, 0, 1, 1], [], []>} : vector<32x128xbf16>, vector<128x256xbf16>, vector<32x256xf32> -> vector<32x256xf32>
    %c0_3 = arith.constant 0 : index
    %c0_4 = arith.constant 0 : index
    %4 = vector.load %arg5[%c0_3, %c0_4] : memref<1x256xf32, #tpu.memory_space<vmem>>, vector<1x256xf32>
    %5 = vector.broadcast %4 : vector<1x256xf32> to vector<32x256xf32>
    %6 = arith.addf %3, %5 : vector<32x256xf32>
    %cst_5 = arith.constant 0.000000e+00 : f32
    %7 = vector.broadcast %cst_5 : f32 to vector<32x256xf32>
    %8 = arith.maximumf %6, %7 : vector<32x256xf32>
    %9 = arith.truncf %8 : vector<32x256xf32> to vector<32x256xbf16>
    %c0_6 = arith.constant 0 : index
    %c0_7 = arith.constant 0 : index
    %10 = vector.load %arg6[%c0_6, %c0_7] : memref<256x128xbf16, #tpu.memory_space<vmem>>, vector<256x128xbf16>
    %cst_8 = arith.constant dense<0.000000e+00> : vector<32x128xf32>
    %11 = tpu.matmul %9, %10, %cst_8 {dimension_numbers = #tpu.dot_dimension_numbers<[1], [0], [0], [1], [0, 0, 1, 1], [], []>} : vector<32x256xbf16>, vector<256x128xbf16>, vector<32x128xf32> -> vector<32x128xf32>
    %c0_9 = arith.constant 0 : index
    %c0_10 = arith.constant 0 : index
    %12 = vector.load %arg7[%c0_9, %c0_10] : memref<1x128xf32, #tpu.memory_space<vmem>>, vector<1x128xf32>
    %13 = vector.broadcast %12 : vector<1x128xf32> to vector<32x128xf32>
    %14 = arith.addf %11, %13 : vector<32x128xf32>
    %15 = arith.addf %14, %0 : vector<32x128xf32>
    %c0_11 = arith.constant 0 : index
    %c0_12 = arith.constant 0 : index
    %16 = vector.load %arg2[%c0_11, %c0_12] : memref<1x128xf32, #tpu.memory_space<vmem>>, vector<1x128xf32>
    %c0_13 = arith.constant 0 : index
    %c0_14 = arith.constant 0 : index
    %17 = vector.load %arg3[%c0_13, %c0_14] : memref<1x128xf32, #tpu.memory_space<vmem>>, vector<1x128xf32>
    %cst_15 = arith.constant dense<0.000000e+00> : vector<32xf32>
    %18 = vector.multi_reduction <add>, %15, %cst_15 [1] : vector<32x128xf32> to vector<32xf32>
    %19 = vector.shape_cast %18 : vector<32xf32> to vector<32x1xf32>
    %cst_16 = arith.constant 1.280000e+02 : f32
    %20 = vector.broadcast %cst_16 : f32 to vector<32x1xf32>
    %21 = arith.divf %19, %20 : vector<32x1xf32>
    %22 = vector.broadcast %21 : vector<32x1xf32> to vector<32x128xf32>
    %23 = arith.subf %15, %22 : vector<32x128xf32>
    %24 = arith.mulf %23, %23 : vector<32x128xf32>
    %cst_17 = arith.constant dense<0.000000e+00> : vector<32xf32>
    %25 = vector.multi_reduction <add>, %24, %cst_17 [1] : vector<32x128xf32> to vector<32xf32>
    %26 = vector.shape_cast %25 : vector<32xf32> to vector<32x1xf32>
    %cst_18 = arith.constant 1.280000e+02 : f32
    %27 = vector.broadcast %cst_18 : f32 to vector<32x1xf32>
    %28 = arith.divf %26, %27 : vector<32x1xf32>
    %29 = vector.broadcast %21 : vector<32x1xf32> to vector<32x128xf32>
    %30 = arith.subf %15, %29 : vector<32x128xf32>
    %cst_19 = arith.constant 9.99999997E-7 : f32
    %31 = vector.broadcast %cst_19 : f32 to vector<32x1xf32>
    %32 = arith.addf %28, %31 : vector<32x1xf32>
    %33 = math.rsqrt %32 : vector<32x1xf32>
    %34 = vector.broadcast %33 : vector<32x1xf32> to vector<32x128xf32>
    %35 = arith.mulf %30, %34 : vector<32x128xf32>
    %36 = vector.broadcast %16 : vector<1x128xf32> to vector<32x128xf32>
    %37 = arith.mulf %35, %36 : vector<32x128xf32>
    %38 = vector.broadcast %17 : vector<1x128xf32> to vector<32x128xf32>
    %39 = arith.addf %37, %38 : vector<32x128xf32>
    %c0_20 = arith.constant 0 : index
    %c0_21 = arith.constant 0 : index
    %40 = vector.load %arg8[%c0_20, %c0_21] : memref<32x128xf32, #tpu.memory_space<vmem>>, vector<32x128xf32>
    tpu.vector_store %arg8[%c0_20, %c0_21], %39 {strides = array<i32>} : memref<32x128xf32, #tpu.memory_space<vmem>>, vector<32x128xf32>,
    return
  }
  func.func @transform_0(%arg0: i32) -> (i32, i32) {
    %c0_i32 = arith.constant 0 : i32
    %c0_i32_0 = arith.constant 0 : i32
    return %arg0, %c0_i32 : i32, i32
  }
  func.func @transform_1(%arg0: i32) -> (i32, i32) {
    %c0_i32 = arith.constant 0 : i32
    %c0_i32_0 = arith.constant 0 : i32
    %c0_i32_1 = arith.constant 0 : i32
    return %c0_i32, %c0_i32_0 : i32, i32
  }
  func.func @transform_2(%arg0: i32) -> (i32, i32) {
    %c0_i32 = arith.constant 0 : i32
    %c0_i32_0 = arith.constant 0 : i32
    %c0_i32_1 = arith.constant 0 : i32
    return %c0_i32, %c0_i32_0 : i32, i32
  }
  func.func @transform_3(%arg0: i32) -> (i32, i32) {
    %c0_i32 = arith.constant 0 : i32
    %c0_i32_0 = arith.constant 0 : i32
    %c0_i32_1 = arith.constant 0 : i32
    return %c0_i32, %c0_i32_0 : i32, i32
  }
  func.func @transform_4(%arg0: i32) -> (i32, i32) {
    %c0_i32 = arith.constant 0 : i32
    %c0_i32_0 = arith.constant 0 : i32
    %c0_i32_1 = arith.constant 0 : i32
    return %c0_i32, %c0_i32_0 : i32, i32
  }
  func.func @transform_5(%arg0: i32) -> (i32, i32) {
    %c0_i32 = arith.constant 0 : i32
    %c0_i32_0 = arith.constant 0 : i32
    %c0_i32_1 = arith.constant 0 : i32
    return %c0_i32, %c0_i32_0 : i32, i32
  }
  func.func @transform_6(%arg0: i32) -> (i32, i32) {
    %c0_i32 = arith.constant 0 : i32
    %c0_i32_0 = arith.constant 0 : i32
    %c0_i32_1 = arith.constant 0 : i32
    return %c0_i32, %c0_i32_0 : i32, i32
  }
  func.func @transform_7(%arg0: i32) -> (i32, i32) {
    %c0_i32 = arith.constant 0 : i32
    %c0_i32_0 = arith.constant 0 : i32
    return %arg0, %c0_i32 : i32, i32
  }
}

</mosaic_0001>

<llo_original>
// kernel: tpu_custom_call.1
$region0: #{tpu_custom_call.1}
  #allocation0 [shape = 'u32[]', space=smem, size = 0x4, offset = 0x4, fixed_abs, tag = 'smem constant byte address 0x4 - core index']
  #allocation1 [shape = 'u32[144,128]{1,0:T(1,128)}', space=vmem, size = 0x12000, scoped, tag = 'internal scratch']
  %s0 = inlined_call_operand.hbm [shape: f32[32,128], index: 0, kind: input, shape index: {}]
  %s1 = inlined_call_operand.vmem [shape: f32[1,128], index: 1, kind: input, shape index: {}]
  %s2 = inlined_call_operand.vmem [shape: f32[1,128], index: 2, kind: input, shape index: {}]
  %s3 = inlined_call_operand.hbm [shape: bf16[128,256], index: 3, kind: input, shape index: {}]
  %s4 = inlined_call_operand.vmem [shape: f32[1,256], index: 4, kind: input, shape index: {}]
  %s5 = inlined_call_operand.hbm [shape: bf16[256,128], index: 5, kind: input, shape index: {}]
  %s6 = inlined_call_operand.vmem [shape: f32[1,128], index: 6, kind: input, shape index: {}]
  %s7 = inlined_call_operand.hbm [shape: f32[32,128], index: 7, kind: output, shape index: {}]
  %s8 = sld [smem:[#allocation0]]
  $region50: #{tpu_custom_call.1} parent=0
    _
  %s10 = ssub.s32 1, %s8
  %s11 = scalar_select 0, %s10, %s8
  $region1: #{tpu_custom_call.1} parent=0
    #allocation2 [shape = 'u8[16384]{0}', space=vmem, size = 0x4000, scoped, tag = 'input window, operand 0, single buffered']
    #allocation3 [shape = 's32[1]{0}', space=sflag, size = 0x4, scoped, tag = 'scoped memory for tpu_custom_call.1']
    #allocation4 [shape = 's32[1]{0}', space=sflag, size = 0x4, scoped, tag = 'scoped memory for tpu_custom_call.1']
    #allocation5 [shape = 'u8[65536]{0}', space=vmem, size = 0x10000, scoped, tag = 'input window, operand 3, single buffered']
    #allocation6 [shape = 's32[1]{0}', space=sflag, size = 0x4, scoped, tag = 'scoped memory for tpu_custom_call.1']
    #allocation7 [shape = 'u8[65536]{0}', space=vmem, size = 0x10000, scoped, tag = 'input window, operand 5, single buffered']
    #allocation8 [shape = 'u8[16384]{0}', space=vmem, size = 0x4000, scoped, tag = 'output window, operand 0, single buffered']
    %12 = vsyncpa [#allocation3], 0
    %13 = vsyncpa [#allocation6], 0
    %14 = vsyncpa [#allocation4], 0
    // Predicated region
    $region2: #{tpu_custom_call.1} parent=1 // pred_check
      _
    $region3: #{tpu_custom_call.1} parent=1 // pred_check_branch
      %16 = sbr.rel (0) target = $region5
    $region4: #{tpu_custom_call.1} parent=1 // pred_region
      %s18 = ssub.s32 512, 512
      %19 = vsyncadd [#allocation3], %s18
      %s20 = sshll.u32 [#allocation2], 4
      %s21 = int_to_ptr.vmem [resolvable:$true] %s20
      %26 = dma.hbm_to_vmem [thread:$0]  %s0, 512, %s21, [#allocation3], 128, 128, 8
    $region5: #{tpu_custom_call.1} parent=1 // pred_fallthru
      _
    // Predicated region
    $region6: #{tpu_custom_call.1} parent=1 // pred_check
      _
    $region7: #{tpu_custom_call.1} parent=1 // pred_check_branch
      %28 = sbr.rel (0) target = $region9
    $region8: #{tpu_custom_call.1} parent=1 // pred_region
      _
    $region9: #{tpu_custom_call.1} parent=1 // pred_fallthru
      _
    // Predicated region
    $region10: #{tpu_custom_call.1} parent=1 // pred_check
      _
    $region11: #{tpu_custom_call.1} parent=1 // pred_check_branch
      %30 = sbr.rel (0) target = $region13
    $region12: #{tpu_custom_call.1} parent=1 // pred_region
      _
    $region13: #{tpu_custom_call.1} parent=1 // pred_fallthru
      _
    // Predicated region
    $region14: #{tpu_custom_call.1} parent=1 // pred_check
      _
    $region15: #{tpu_custom_call.1} parent=1 // pred_check_branch
      %32 = sbr.rel (0) target = $region17
    $region16: #{tpu_custom_call.1} parent=1 // pred_region
      %s34 = ssub.s32 2048, 2048
      %35 = vsyncadd [#allocation6], %s34
      %s36 = sshll.u32 [#allocation5], 4
      %s37 = int_to_ptr.vmem [resolvable:$true] %s36
      %42 = dma.hbm_to_vmem [thread:$0]  %s3, 2048, %s37, [#allocation6], 128, 128, 8
    $region17: #{tpu_custom_call.1} parent=1 // pred_fallthru
      _
    // Predicated region
    $region18: #{tpu_custom_call.1} parent=1 // pred_check
      _
    $region19: #{tpu_custom_call.1} parent=1 // pred_check_branch
      %44 = sbr.rel (0) target = $region21
    $region20: #{tpu_custom_call.1} parent=1 // pred_region
      _
    $region21: #{tpu_custom_call.1} parent=1 // pred_fallthru
      _
    // Predicated region
    $region22: #{tpu_custom_call.1} parent=1 // pred_check
      _
    $region23: #{tpu_custom_call.1} parent=1 // pred_check_branch
      %46 = sbr.rel (0) target = $region25
    $region24: #{tpu_custom_call.1} parent=1 // pred_region
      %s48 = ssub.s32 2048, 2048
      %49 = vsyncadd [#allocation6], %s48
      %s50 = sshll.u32 [#allocation7], 4
      %s51 = int_to_ptr.vmem [resolvable:$true] %s50
      %56 = dma.hbm_to_vmem [thread:$0]  %s5, 2048, %s51, [#allocation6], 64, 64, 4
    $region25: #{tpu_custom_call.1} parent=1 // pred_fallthru
      _
    // Predicated region
    $region26: #{tpu_custom_call.1} parent=1 // pred_check
      _
    $region27: #{tpu_custom_call.1} parent=1 // pred_check_branch
      %58 = sbr.rel (0) target = $region29
    $region28: #{tpu_custom_call.1} parent=1 // pred_region
      _
    $region29: #{tpu_custom_call.1} parent=1 // pred_fallthru
      _
    // Predicated region
    $region30: #{tpu_custom_call.1} parent=1 // pred_check
      _
    $region31: #{tpu_custom_call.1} parent=1 // pred_check_branch
      %60 = sbr.rel (0) target = $region33
    $region32: #{tpu_custom_call.1} parent=1 // pred_region
      %61 = dma.done [#allocation3], 512
    $region33: #{tpu_custom_call.1} parent=1 // pred_fallthru
      _
    // Predicated region
    $region34: #{tpu_custom_call.1} parent=1 // pred_check
      _
    $region35: #{tpu_custom_call.1} parent=1 // pred_check_branch
      %63 = sbr.rel (0) target = $region37
    $region36: #{tpu_custom_call.1} parent=1 // pred_region
      %64 = dma.done [#allocation6], 2048
    $region37: #{tpu_custom_call.1} parent=1 // pred_fallthru
      _
    // Predicated region
    $region38: #{tpu_custom_call.1} parent=1 // pred_check
      _
    $region39: #{tpu_custom_call.1} parent=1 // pred_check_branch
      %66 = sbr.rel (0) target = $region41
    $region40: #{tpu_custom_call.1} parent=1 // pred_region
      %67 = dma.done [#allocation6], 2048
    $region41: #{tpu_custom_call.1} parent=1 // pred_fallthru
      _
    %v69 = vld [vmem:[#allocation2] sm:$0xff]
    %v70 = vld [vmem:[#allocation2 + $0x8] sm:$0xff]
    %v71 = vld [vmem:[#allocation2 + $0x10] sm:$0xff]
    %v72 = vld [vmem:[#allocation2 + $0x18] sm:$0xff]
    %v73 = vpack.c.bf16 %v70, %v69
    %v74 = vpack.c.bf16 %v72, %v71
    %v75 = vld [vmem:[#allocation5] sm:$0xff]
    %v76 = vld [vmem:[#allocation5 + $0x8] sm:$0xff]
    %v77 = vld [vmem:[#allocation5 + $0x10] sm:$0xff]
    %v78 = vld [vmem:[#allocation5 + $0x18] sm:$0xff]
    %v79 = vld [vmem:[#allocation5 + $0x20] sm:$0xff]
    %v80 = vld [vmem:[#allocation5 + $0x28] sm:$0xff]
    %v81 = vld [vmem:[#allocation5 + $0x30] sm:$0xff]
    %v82 = vld [vmem:[#allocation5 + $0x38] sm:$0xff]
    %v83 = vld [vmem:[#allocation5 + $0x40] sm:$0xff]
    %v84 = vld [vmem:[#allocation5 + $0x48] sm:$0xff]
    %v85 = vld [vmem:[#allocation5 + $0x50] sm:$0xff]
    %v86 = vld [vmem:[#allocation5 + $0x58] sm:$0xff]
    %v87 = vld [vmem:[#allocation5 + $0x60] sm:$0xff]
    %v88 = vld [vmem:[#allocation5 + $0x68] sm:$0xff]
    %v89 = vld [vmem:[#allocation5 + $0x70] sm:$0xff]
    %v90 = vld [vmem:[#allocation5 + $0x78] sm:$0xff]
    %v91 = vld [vmem:[%s4] sm:$0x3]
    %v93 = vlaneseq
    %v94 = vshrl.u32 %v93, 7
    %v95 = vsub.s32 0, %v94
    %v96 = vrot.slane %v91, %v95
    %v97 = vlaneseq
    %v98 = vshrl.u32 %v97, 7
    %v99 = vsub.s32 1, %v98
    %v100 = vrot.slane %v91, %v99
    %v119 = vunpack.c.l.b16 %v75
    %v120 = vunpack.c.h.b16 %v75
    %v121 = vunpack.c.l.b16 %v76
    %v122 = vunpack.c.h.b16 %v76
    %v123 = vunpack.c.l.b16 %v77
    %v124 = vunpack.c.h.b16 %v77
    %v125 = vunpack.c.l.b16 %v78
    %v126 = vunpack.c.h.b16 %v78
    %v127 = vunpack.c.l.b16 %v79
    %v128 = vunpack.c.h.b16 %v79
    %v129 = vunpack.c.l.b16 %v80
    %v130 = vunpack.c.h.b16 %v80
    %v131 = vunpack.c.l.b16 %v81
    %v132 = vunpack.c.h.b16 %v81
    %v133 = vunpack.c.l.b16 %v82
    %v134 = vunpack.c.h.b16 %v82
    %v135 = vunpack.c.l.b16 %v83
    %v136 = vunpack.c.h.b16 %v83
    %v137 = vunpack.c.l.b16 %v84
    %v138 = vunpack.c.h.b16 %v84
    %v139 = vunpack.c.l.b16 %v85
    %v140 = vunpack.c.h.b16 %v85
    %v141 = vunpack.c.l.b16 %v86
    %v142 = vunpack.c.h.b16 %v86
    %v143 = vunpack.c.l.b16 %v87
    %v144 = vunpack.c.h.b16 %v87
    %v145 = vunpack.c.l.b16 %v88
    %v146 = vunpack.c.h.b16 %v88
    %v147 = vunpack.c.l.b16 %v89
    %v148 = vunpack.c.h.b16 %v89
    %v149 = vunpack.c.l.b16 %v90
    %v150 = vunpack.c.h.b16 %v90
    %v151 = vpack.c.b16 %v121, %v119
    %v152 = vpack.c.b16 %v122, %v120
    %v153 = vpack.c.b16 %v125, %v123
    %v154 = vpack.c.b16 %v126, %v124
    %v155 = vpack.c.b16 %v129, %v127
    %v156 = vpack.c.b16 %v130, %v128
    %v157 = vpack.c.b16 %v133, %v131
    %v158 = vpack.c.b16 %v134, %v132
    %v159 = vpack.c.b16 %v137, %v135
    %v160 = vpack.c.b16 %v138, %v136
    %v161 = vpack.c.b16 %v141, %v139
    %v162 = vpack.c.b16 %v142, %v140
    %v163 = vpack.c.b16 %v145, %v143
    %v164 = vpack.c.b16 %v146, %v144
    %v165 = vpack.c.b16 %v149, %v147
    %v166 = vpack.c.b16 %v150, %v148
    %183 = vmatprep.subr.bf16.mxu0 %v152
    %184 = vmatpush1.bf16.msra.mxu0 %v151
    %185 = vmatprep.subr.bf16.mxu0 %v154
    %186 = vmatpush1.bf16.msra.mxu0 %v153
    %187 = vmatprep.subr.bf16.mxu0 %v156
    %188 = vmatpush1.bf16.msra.mxu0 %v155
    %189 = vmatprep.subr.bf16.mxu0 %v158
    %190 = vmatpush1.bf16.msra.mxu0 %v157
    %191 = vmatprep.subr.bf16.mxu0 %v160
    %192 = vmatpush1.bf16.msra.mxu0 %v159
    %193 = vmatprep.subr.bf16.mxu0 %v162
    %194 = vmatpush1.bf16.msra.mxu0 %v161
    %195 = vmatprep.subr.bf16.mxu0 %v164
    %196 = vmatpush1.bf16.msra.mxu0 %v163
    %197 = vmatprep.subr.bf16.mxu0 %v166
    %198 = vmatpush1.bf16.msra.mxu0 %v165
    %199 = vmatprep.subr.bf16.mxu0 0
    %200 = vmatpush1.bf16.msra.mxu0 0
    %201 = vmatprep.subr.bf16.mxu0 0
    %202 = vmatpush1.bf16.msra.mxu0 0
    %203 = vmatprep.subr.bf16.mxu0 0
    %204 = vmatpush1.bf16.msra.mxu0 0
    %205 = vmatprep.subr.bf16.mxu0 0
    %206 = vmatpush1.bf16.msra.mxu0 0
    %207 = vmatprep.subr.bf16.mxu0 0
    %208 = vmatpush1.bf16.msra.mxu0 0
    %209 = vmatprep.subr.bf16.mxu0 0
    %210 = vmatpush1.bf16.msra.mxu0 0
    %211 = vmatprep.subr.bf16.mxu0 0
    %212 = vmatpush1.bf16.msra.mxu0 0
    %213 = vmatprep.subr.bf16.mxu0 0
    %214 = vmatpush1.bf16.msra.mxu0 0
    %215 = vmatprep.mubr.bf16.mxu0 0
    %216 = vmatmul.mubr.bf16.gmra.mrb[0].mxu0 %v73
    %v217 = vpop.f32.mrb[0].mxu0
    %v218 = vadd.f32 %v96, %v217
    %v219 = vpop.f32.mrb[0].mxu0
    %v220 = vadd.f32 %v100, %v219
    %v221 = vpop.f32.mrb[0].mxu0
    %v222 = vadd.f32 %v96, %v221
    %v223 = vpop.f32.mrb[0].mxu0
    %v224 = vadd.f32 %v100, %v223
    %225 = vmatprep.mubr.bf16.mxu0 0
    %226 = vmatmul.mubr.bf16.gmra.mrb[0].mxu0 %v74
    %v227 = vpop.f32.mrb[0].mxu0
    %v228 = vadd.f32 %v96, %v227
    %v229 = vpop.f32.mrb[0].mxu0
    %v230 = vadd.f32 %v100, %v229
    %v231 = vpop.f32.mrb[0].mxu0
    %v232 = vadd.f32 %v96, %v231
    %v233 = vpop.f32.mrb[0].mxu0
    %v234 = vadd.f32 %v100, %v233
    %235 = vdwg.mxu0
    %v236 = vmax.f32 %v218, 0.0
    %v237 = vmax.f32 %v220, 0.0
    %v238 = vmax.f32 %v222, 0.0
    %v239 = vmax.f32 %v224, 0.0
    %v240 = vmax.f32 %v228, 0.0
    %v241 = vmax.f32 %v230, 0.0
    %v242 = vmax.f32 %v232, 0.0
    %v243 = vmax.f32 %v234, 0.0
    %v244 = vpack.c.bf16 %v238, %v236
    %v245 = vpack.c.bf16 %v239, %v237
    %v246 = vpack.c.bf16 %v242, %v240
    %v247 = vpack.c.bf16 %v243, %v241
    %v248 = vld [vmem:[#allocation7] sm:$0xf]
    %v249 = vld [vmem:[#allocation7 + $0x4] sm:$0xf]
    %v250 = vld [vmem:[#allocation7 + $0x8] sm:$0xf]
    %v251 = vld [vmem:[#allocation7 + $0xc] sm:$0xf]
    %v252 = vld [vmem:[#allocation7 + $0x10] sm:$0xf]
    %v253 = vld [vmem:[#allocation7 + $0x14] sm:$0xf]
    %v254 = vld [vmem:[#allocation7 + $0x18] sm:$0xf]
    %v255 = vld [vmem:[#allocation7 + $0x1c] sm:$0xf]
    %v256 = vld [vmem:[#allocation7 + $0x20] sm:$0xf]
    %v257 = vld [vmem:[#allocation7 + $0x24] sm:$0xf]
    %v258 = vld [vmem:[#allocation7 + $0x28] sm:$0xf]
    %v259 = vld [vmem:[#allocation7 + $0x2c] sm:$0xf]
    %v260 = vld [vmem:[#allocation7 + $0x30] sm:$0xf]
    %v261 = vld [vmem:[#allocation7 + $0x34] sm:$0xf]
    %v262 = vld [vmem:[#allocation7 + $0x38] sm:$0xf]
    %v263 = vld [vmem:[#allocation7 + $0x3c] sm:$0xf]
    %v264 = vld [vmem:[#allocation7 + $0x40] sm:$0xf]
    %v265 = vld [vmem:[#allocation7 + $0x44] sm:$0xf]
    %v266 = vld [vmem:[#allocation7 + $0x48] sm:$0xf]
    %v267 = vld [vmem:[#allocation7 + $0x4c] sm:$0xf]
    %v268 = vld [vmem:[#allocation7 + $0x50] sm:$0xf]
    %v269 = vld [vmem:[#allocation7 + $0x54] sm:$0xf]
    %v270 = vld [vmem:[#allocation7 + $0x58] sm:$0xf]
    %v271 = vld [vmem:[#allocation7 + $0x5c] sm:$0xf]
    %v272 = vld [vmem:[#allocation7 + $0x60] sm:$0xf]
    %v273 = vld [vmem:[#allocation7 + $0x64] sm:$0xf]
    %v274 = vld [vmem:[#allocation7 + $0x68] sm:$0xf]
    %v275 = vld [vmem:[#allocation7 + $0x6c] sm:$0xf]
    %v276 = vld [vmem:[#allocation7 + $0x70] sm:$0xf]
    %v277 = vld [vmem:[#allocation7 + $0x74] sm:$0xf]
    %v278 = vld [vmem:[#allocation7 + $0x78] sm:$0xf]
    %v279 = vld [vmem:[#allocation7 + $0x7c] sm:$0xf]
    %v280 = vld [vmem:[%s6] sm:$0x1]
    %v282 = vlaneseq
    %v283 = vshrl.u32 %v282, 7
    %v284 = vsub.s32 0, %v283
    %v285 = vrot.slane %v280, %v284
    %v319 = vunpack.c.l.b16 %v248
    %v320 = vunpack.c.l.b16 %v249
    %v321 = vunpack.c.l.b16 %v250
    %v322 = vunpack.c.l.b16 %v251
    %v323 = vunpack.c.l.b16 %v252
    %v324 = vunpack.c.l.b16 %v253
    %v325 = vunpack.c.l.b16 %v254
    %v326 = vunpack.c.l.b16 %v255
    %v327 = vunpack.c.l.b16 %v256
    %v328 = vunpack.c.l.b16 %v257
    %v329 = vunpack.c.l.b16 %v258
    %v330 = vunpack.c.l.b16 %v259
    %v331 = vunpack.c.l.b16 %v260
    %v332 = vunpack.c.l.b16 %v261
    %v333 = vunpack.c.l.b16 %v262
    %v334 = vunpack.c.l.b16 %v263
    %v335 = vunpack.c.l.b16 %v264
    %v336 = vunpack.c.l.b16 %v265
    %v337 = vunpack.c.l.b16 %v266
    %v338 = vunpack.c.l.b16 %v267
    %v339 = vunpack.c.l.b16 %v268
    %v340 = vunpack.c.l.b16 %v269
    %v341 = vunpack.c.l.b16 %v270
    %v342 = vunpack.c.l.b16 %v271
    %v343 = vunpack.c.l.b16 %v272
    %v344 = vunpack.c.l.b16 %v273
    %v345 = vunpack.c.l.b16 %v274
    %v346 = vunpack.c.l.b16 %v275
    %v347 = vunpack.c.l.b16 %v276
    %v348 = vunpack.c.l.b16 %v277
    %v349 = vunpack.c.l.b16 %v278
    %v350 = vunpack.c.l.b16 %v279
    %v351 = vpack.c.b16 %v320, %v319
    %v352 = vpack.c.b16 %v322, %v321
    %v353 = vpack.c.b16 %v324, %v323
    %v354 = vpack.c.b16 %v326, %v325
    %v355 = vpack.c.b16 %v328, %v327
    %v356 = vpack.c.b16 %v330, %v329
    %v357 = vpack.c.b16 %v332, %v331
    %v358 = vpack.c.b16 %v334, %v333
    %v359 = vpack.c.b16 %v336, %v335
    %v360 = vpack.c.b16 %v338, %v337
    %v361 = vpack.c.b16 %v340, %v339
    %v362 = vpack.c.b16 %v342, %v341
    %v363 = vpack.c.b16 %v344, %v343
    %v364 = vpack.c.b16 %v346, %v345
    %v365 = vpack.c.b16 %v348, %v347
    %v366 = vpack.c.b16 %v350, %v349
    %383 = vmatprep.subr.bf16.mxu0 0
    %384 = vmatpush1.bf16.msra.mxu0 %v351
    %385 = vmatprep.subr.bf16.mxu0 0
    %386 = vmatpush1.bf16.msra.mxu0 %v352
    %387 = vmatprep.subr.bf16.mxu0 0
    %388 = vmatpush1.bf16.msra.mxu0 %v353
    %389 = vmatprep.subr.bf16.mxu0 0
    %390 = vmatpush1.bf16.msra.mxu0 %v354
    %391 = vmatprep.subr.bf16.mxu0 0
    %392 = vmatpush1.bf16.msra.mxu0 %v355
    %393 = vmatprep.subr.bf16.mxu0 0
    %394 = vmatpush1.bf16.msra.mxu0 %v356
    %395 = vmatprep.subr.bf16.mxu0 0
    %396 = vmatpush1.bf16.msra.mxu0 %v357
    %397 = vmatprep.subr.bf16.mxu0 0
    %398 = vmatpush1.bf16.msra.mxu0 %v358
    %399 = vmatprep.subr.bf16.mxu0 0
    %400 = vmatpush1.bf16.msra.mxu0 %v359
    %401 = vmatprep.subr.bf16.mxu0 0
    %402 = vmatpush1.bf16.msra.mxu0 %v360
    %403 = vmatprep.subr.bf16.mxu0 0
    %404 = vmatpush1.bf16.msra.mxu0 %v361
    %405 = vmatprep.subr.bf16.mxu0 0
    %406 = vmatpush1.bf16.msra.mxu0 %v362
    %407 = vmatprep.subr.bf16.mxu0 0
    %408 = vmatpush1.bf16.msra.mxu0 %v363
    %409 = vmatprep.subr.bf16.mxu0 0
    %410 = vmatpush1.bf16.msra.mxu0 %v364
    %411 = vmatprep.subr.bf16.mxu0 0
    %412 = vmatpush1.bf16.msra.mxu0 %v365
    %413 = vmatprep.subr.bf16.mxu0 0
    %414 = vmatpush1.bf16.msra.mxu0 %v366
    %415 = vmatprep.mubr.bf16.mxu0 %v245
    %416 = vmatmul.mubr.bf16.gmra.mrb[0].mxu0 %v244
    %v417 = vpop.f32.mrb[0].mxu0
    %v418 = vadd.f32 %v285, %v417
    %v419 = vpop.f32.mrb[0].mxu0
    %v420 = vpop.f32.mrb[0].mxu0
    %v421 = vadd.f32 %v285, %v420
    %v422 = vpop.f32.mrb[0].mxu0
    %423 = vmatprep.mubr.bf16.mxu0 %v247
    %424 = vmatmul.mubr.bf16.gmra.mrb[0].mxu0 %v246
    %v425 = vpop.f32.mrb[0].mxu0
    %v426 = vadd.f32 %v285, %v425
    %v427 = vpop.f32.mrb[0].mxu0
    %v428 = vpop.f32.mrb[0].mxu0
    %v429 = vadd.f32 %v285, %v428
    %v430 = vpop.f32.mrb[0].mxu0
    %431 = vdwg.mxu0
    %v432 = vadd.f32 %v418, %v69
    %v433 = vadd.f32 %v421, %v70
    %v434 = vadd.f32 %v426, %v71
    %v435 = vadd.f32 %v429, %v72
    %v436 = vld [vmem:[%s1] sm:$0x1]
    %v437 = vld [vmem:[%s2] sm:$0x1]
    %438 = vadd.xlane.f32.xlu0 %v432
    %v439 = vpop.xlane.xlu0 %438
    %440 = vadd.xlane.f32.xlu0 %v433
    %v441 = vpop.xlane.xlu0 %440
    %442 = vadd.xlane.f32.xlu0 %v434
    %v443 = vpop.xlane.xlu0 %442
    %444 = vadd.xlane.f32.xlu0 %v435
    %v445 = vpop.xlane.xlu0 %444
    %v446 = vrcp.pop 128.0
    %v447 = vmul.f32 %v439, %v446
    %v448 = vmul.f32 %v441, %v446
    %v449 = vmul.f32 %v443, %v446
    %v450 = vmul.f32 %v445, %v446
    %v451 = vsub.f32 %v432, %v447
    %v452 = vsub.f32 %v433, %v448
    %v453 = vsub.f32 %v434, %v449
    %v454 = vsub.f32 %v435, %v450
    %v455 = vmul.f32 %v451, %v451
    %v456 = vmul.f32 %v452, %v452
    %v457 = vmul.f32 %v453, %v453
    %v458 = vmul.f32 %v454, %v454
    %459 = vadd.xlane.f32.xlu0 %v455
    %v460 = vpop.xlane.xlu0 %459
    %461 = vadd.xlane.f32.xlu0 %v456
    %v462 = vpop.xlane.xlu0 %461
    %463 = vadd.xlane.f32.xlu0 %v457
    %v464 = vpop.xlane.xlu0 %463
    %465 = vadd.xlane.f32.xlu0 %v458
    %v466 = vpop.xlane.xlu0 %465
    %v467 = vmul.f32 %v460, %v446
    %v468 = vmul.f32 %v462, %v446
    %v469 = vmul.f32 %v464, %v446
    %v470 = vmul.f32 %v466, %v446
    %v471 = vadd.f32 %v467, 1e-06
    %v472 = vadd.f32 %v468, 1e-06
    %v473 = vadd.f32 %v469, 1e-06
    %v474 = vadd.f32 %v470, 1e-06
    %v475 = vrsqrt.pop %v471
    %v476 = vrsqrt.pop %v472
    %v477 = vrsqrt.pop %v473
    %v478 = vrsqrt.pop %v474
    %v479 = vmul.f32 %v451, %v475
    %v480 = vmul.f32 %v452, %v476
    %v481 = vmul.f32 %v453, %v477
    %v482 = vmul.f32 %v454, %v478
    %v484 = vlaneseq
    %v485 = vshrl.u32 %v484, 7
    %v486 = vsub.s32 0, %v485
    %v487 = vrot.slane %v436, %v486
    %v489 = vmul.f32 %v479, %v487
    %v490 = vmul.f32 %v480, %v487
    %v491 = vmul.f32 %v481, %v487
    %v492 = vmul.f32 %v482, %v487
    %v494 = vlaneseq
    %v495 = vshrl.u32 %v494, 7
    %v496 = vsub.s32 0, %v495
    %v497 = vrot.slane %v437, %v496
    %v499 = vadd.f32 %v489, %v497
    %v500 = vadd.f32 %v490, %v497
    %v501 = vadd.f32 %v491, %v497
    %v502 = vadd.f32 %v492, %v497
    %503 = vst [vmem:[#allocation8] sm:$0xff] %v499
    %504 = vst [vmem:[#allocation8 + $0x8] sm:$0xff] %v500
    %505 = vst [vmem:[#allocation8 + $0x10] sm:$0xff] %v501
    %506 = vst [vmem:[#allocation8 + $0x18] sm:$0xff] %v502
    // Predicated region
    $region42: #{tpu_custom_call.1} parent=1 // pred_check
      _
    $region43: #{tpu_custom_call.1} parent=1 // pred_check_branch
      %508 = sbr.rel (0) target = $region45
    $region44: #{tpu_custom_call.1} parent=1 // pred_region
      %s510 = ssub.s32 512, 512
      %511 = vsyncadd [#allocation4], %s510
      %s512 = sshll.u32 [#allocation8], 4
      %s513 = int_to_ptr.vmem [resolvable:$true] %s512
      %518 = dma.vmem_to_hbm [thread:$0]  %s513, 512, %s7, [#allocation4], 128, 128, 8
    $region45: #{tpu_custom_call.1} parent=1 // pred_fallthru
      _
    // Predicated region
    $region46: #{tpu_custom_call.1} parent=1 // pred_check
      _
    $region47: #{tpu_custom_call.1} parent=1 // pred_check_branch
      %520 = sbr.rel (0) target = $region49
    $region48: #{tpu_custom_call.1} parent=1 // pred_region
      %521 = dma.done [#allocation4], 512
    $region49: #{tpu_custom_call.1} parent=1 // pred_fallthru
      _
    %522 = vsyncpa [#allocation3], 1
    %523 = vsyncpa [#allocation6], 1
    %524 = vsyncpa [#allocation4], 1

// kernel: tpu_custom_call.1
$region0: #{tpu_custom_call.1}
  #allocation0 [shape = 'u32[]', space=smem, size = 0x4, offset = 0x4, fixed_abs, tag = 'smem constant byte address 0x4 - core index']
  #allocation1 [shape = 'u32[144,128]{1,0:T(1,128)}', space=vmem, size = 0x12000, scoped, tag = 'internal scratch']
  %s0 = inlined_call_operand.hbm [shape: f32[32,128], index: 0, kind: input, shape index: {}]
  %s1 = inlined_call_operand.vmem [shape: f32[1,128], index: 1, kind: input, shape index: {}]
  %s2 = inlined_call_operand.vmem [shape: f32[1,128], index: 2, kind: input, shape index: {}]
  %s3 = inlined_call_operand.hbm [shape: bf16[128,256], index: 3, kind: input, shape index: {}]
  %s4 = inlined_call_operand.vmem [shape: f32[1,256], index: 4, kind: input, shape index: {}]
  %s5 = inlined_call_operand.hbm [shape: bf16[256,128], index: 5, kind: input, shape index: {}]
  %s6 = inlined_call_operand.vmem [shape: f32[1,128], index: 6, kind: input, shape index: {}]
  %s7 = inlined_call_operand.hbm [shape: f32[32,128], index: 7, kind: output, shape index: {}]
  %s8 = sld [smem:[#allocation0]]
  $region50: #{tpu_custom_call.1} parent=0
    _
  %s10 = ssub.s32 1, %s8
  %s11 = scalar_select 0, %s10, %s8
  $region1: #{tpu_custom_call.1} parent=0
    #allocation2 [shape = 'u8[16384]{0}', space=vmem, size = 0x4000, scoped, tag = 'input window, operand 0, single buffered']
    #allocation3 [shape = 's32[1]{0}', space=sflag, size = 0x4, scoped, tag = 'scoped memory for tpu_custom_call.1']
    #allocation4 [shape = 's32[1]{0}', space=sflag, size = 0x4, scoped, tag = 'scoped memory for tpu_custom_call.1']
    #allocation5 [shape = 'u8[65536]{0}', space=vmem, size = 0x10000, scoped, tag = 'input window, operand 3, single buffered']
    #allocation6 [shape = 's32[1]{0}', space=sflag, size = 0x4, scoped, tag = 'scoped memory for tpu_custom_call.1']
    #allocation7 [shape = 'u8[65536]{0}', space=vmem, size = 0x10000, scoped, tag = 'input window, operand 5, single buffered']
    #allocation8 [shape = 'u8[16384]{0}', space=vmem, size = 0x4000, scoped, tag = 'output window, operand 0, single buffered']
    %12 = vsyncpa [#allocation3], 0
    %13 = vsyncpa [#allocation6], 0
    %14 = vsyncpa [#allocation4], 0
    // Predicated region
    $region2: #{tpu_custom_call.1} parent=1 // pred_check
      _
    $region3: #{tpu_custom_call.1} parent=1 // pred_check_branch
      %16 = sbr.rel (0) target = $region5
    $region4: #{tpu_custom_call.1} parent=1 // pred_region
      %s18 = ssub.s32 512, 512
      %19 = vsyncadd [#allocation3], %s18
      %s20 = sshll.u32 [#allocation2], 4
      %s21 = int_to_ptr.vmem [resolvable:$true] %s20
      %26 = dma.hbm_to_vmem [thread:$0]  %s0, 512, %s21, [#allocation3], 128, 128, 8
    $region5: #{tpu_custom_call.1} parent=1 // pred_fallthru
      _
    // Predicated region
    $region6: #{tpu_custom_call.1} parent=1 // pred_check
      _
    $region7: #{tpu_custom_call.1} parent=1 // pred_check_branch
      %28 = sbr.rel (0) target = $region9
    $region8: #{tpu_custom_call.1} parent=1 // pred_region
      _
    $region9: #{tpu_custom_call.1} parent=1 // pred_fallthru
      _
    // Predicated region
    $region10: #{tpu_custom_call.1} parent=1 // pred_check
      _
    $region11: #{tpu_custom_call.1} parent=1 // pred_check_branch
      %30 = sbr.rel (0) target = $region13
    $region12: #{tpu_custom_call.1} parent=1 // pred_region
      _
    $region13: #{tpu_custom_call.1} parent=1 // pred_fallthru
      _
    // Predicated region
    $region14: #{tpu_custom_call.1} parent=1 // pred_check
      _
    $region15: #{tpu_custom_call.1} parent=1 // pred_check_branch
      %32 = sbr.rel (0) target = $region17
    $region16: #{tpu_custom_call.1} parent=1 // pred_region
      %s34 = ssub.s32 2048, 2048
      %35 = vsyncadd [#allocation6], %s34
      %s36 = sshll.u32 [#allocation5], 4
      %s37 = int_to_ptr.vmem [resolvable:$true] %s36
      %42 = dma.hbm_to_vmem [thread:$0]  %s3, 2048, %s37, [#allocation6], 128, 128, 8
    $region17: #{tpu_custom_call.1} parent=1 // pred_fallthru
      _
    // Predicated region
    $region18: #{tpu_custom_call.1} parent=1 // pred_check
      _
    $region19: #{tpu_custom_call.1} parent=1 // pred_check_branch
      %44 = sbr.rel (0) target = $region21
    $region20: #{tpu_custom_call.1} parent=1 // pred_region
      _
    $region21: #{tpu_custom_call.1} parent=1 // pred_fallthru
      _
    // Predicated region
    $region22: #{tpu_custom_call.1} parent=1 // pred_check
      _
    $region23: #{tpu_custom_call.1} parent=1 // pred_check_branch
      %46 = sbr.rel (0) target = $region25
    $region24: #{tpu_custom_call.1} parent=1 // pred_region
      %s48 = ssub.s32 2048, 2048
      %49 = vsyncadd [#allocation6], %s48
      %s50 = sshll.u32 [#allocation7], 4
      %s51 = int_to_ptr.vmem [resolvable:$true] %s50
      %56 = dma.hbm_to_vmem [thread:$0]  %s5, 2048, %s51, [#allocation6], 64, 64, 4
    $region25: #{tpu_custom_call.1} parent=1 // pred_fallthru
      _
    // Predicated region
    $region26: #{tpu_custom_call.1} parent=1 // pred_check
      _
    $region27: #{tpu_custom_call.1} parent=1 // pred_check_branch
      %58 = sbr.rel (0) target = $region29
    $region28: #{tpu_custom_call.1} parent=1 // pred_region
      _
    $region29: #{tpu_custom_call.1} parent=1 // pred_fallthru
      _
    // Predicated region
    $region30: #{tpu_custom_call.1} parent=1 // pred_check
      _
    $region31: #{tpu_custom_call.1} parent=1 // pred_check_branch
      %60 = sbr.rel (0) target = $region33
    $region32: #{tpu_custom_call.1} parent=1 // pred_region
      %61 = dma.done [#allocation3], 512
    $region33: #{tpu_custom_call.1} parent=1 // pred_fallthru
      _
    // Predicated region
    $region34: #{tpu_custom_call.1} parent=1 // pred_check
      _
    $region35: #{tpu_custom_call.1} parent=1 // pred_check_branch
      %63 = sbr.rel (0) target = $region37
    $region36: #{tpu_custom_call.1} parent=1 // pred_region
      %64 = dma.done [#allocation6], 2048
    $region37: #{tpu_custom_call.1} parent=1 // pred_fallthru
      _
    // Predicated region
    $region38: #{tpu_custom_call.1} parent=1 // pred_check
      _
    $region39: #{tpu_custom_call.1} parent=1 // pred_check_branch
      %66 = sbr.rel (0) target = $region41
    $region40: #{tpu_custom_call.1} parent=1 // pred_region
      %67 = dma.done [#allocation6], 2048
    $region41: #{tpu_custom_call.1} parent=1 // pred_fallthru
      _
    %v69 = vld [vmem:[#allocation2] sm:$0xff]
    %v70 = vld [vmem:[#allocation2 + $0x8] sm:$0xff]
    %v71 = vld [vmem:[#allocation2 + $0x10] sm:$0xff]
    %v72 = vld [vmem:[#allocation2 + $0x18] sm:$0xff]
    %v73 = vpack.c.bf16 %v70, %v69
    %v74 = vpack.c.bf16 %v72, %v71
    %v75 = vld [vmem:[#allocation5] sm:$0xff]
    %v76 = vld [vmem:[#allocation5 + $0x8] sm:$0xff]
    %v77 = vld [vmem:[#allocation5 + $0x10] sm:$0xff]
    %v78 = vld [vmem:[#allocation5 + $0x18] sm:$0xff]
    %v79 = vld [vmem:[#allocation5 + $0x20] sm:$0xff]
    %v80 = vld [vmem:[#allocation5 + $0x28] sm:$0xff]
    %v81 = vld [vmem:[#allocation5 + $0x30] sm:$0xff]
    %v82 = vld [vmem:[#allocation5 + $0x38] sm:$0xff]
    %v83 = vld [vmem:[#allocation5 + $0x40] sm:$0xff]
    %v84 = vld [vmem:[#allocation5 + $0x48] sm:$0xff]
    %v85 = vld [vmem:[#allocation5 + $0x50] sm:$0xff]
    %v86 = vld [vmem:[#allocation5 + $0x58] sm:$0xff]
    %v87 = vld [vmem:[#allocation5 + $0x60] sm:$0xff]
    %v88 = vld [vmem:[#allocation5 + $0x68] sm:$0xff]
    %v89 = vld [vmem:[#allocation5 + $0x70] sm:$0xff]
    %v90 = vld [vmem:[#allocation5 + $0x78] sm:$0xff]
    %v91 = vld [vmem:[%s4] sm:$0x3]
    %v93 = vlaneseq
    %v94 = vshrl.u32 %v93, 7
    %v95 = vsub.s32 0, %v94
    %v96 = vrot.slane %v91, %v95
    %v97 = vlaneseq
    %v98 = vshrl.u32 %v97, 7
    %v99 = vsub.s32 1, %v98
    %v100 = vrot.slane %v91, %v99
    %v119 = vunpack.c.l.b16 %v75
    %v120 = vunpack.c.h.b16 %v75
    %v121 = vunpack.c.l.b16 %v76
    %v122 = vunpack.c.h.b16 %v76
    %v123 = vunpack.c.l.b16 %v77
    %v124 = vunpack.c.h.b16 %v77
    %v125 = vunpack.c.l.b16 %v78
    %v126 = vunpack.c.h.b16 %v78
    %v127 = vunpack.c.l.b16 %v79
    %v128 = vunpack.c.h.b16 %v79
    %v129 = vunpack.c.l.b16 %v80
    %v130 = vunpack.c.h.b16 %v80
    %v131 = vunpack.c.l.b16 %v81
    %v132 = vunpack.c.h.b16 %v81
    %v133 = vunpack.c.l.b16 %v82
    %v134 = vunpack.c.h.b16 %v82
    %v135 = vunpack.c.l.b16 %v83
    %v136 = vunpack.c.h.b16 %v83
    %v137 = vunpack.c.l.b16 %v84
    %v138 = vunpack.c.h.b16 %v84
    %v139 = vunpack.c.l.b16 %v85
    %v140 = vunpack.c.h.b16 %v85
    %v141 = vunpack.c.l.b16 %v86
    %v142 = vunpack.c.h.b16 %v86
    %v143 = vunpack.c.l.b16 %v87
    %v144 = vunpack.c.h.b16 %v87
    %v145 = vunpack.c.l.b16 %v88
    %v146 = vunpack.c.h.b16 %v88
    %v147 = vunpack.c.l.b16 %v89
    %v148 = vunpack.c.h.b16 %v89
    %v149 = vunpack.c.l.b16 %v90
    %v150 = vunpack.c.h.b16 %v90
    %v151 = vpack.c.b16 %v121, %v119
    %v152 = vpack.c.b16 %v122, %v120
    %v153 = vpack.c.b16 %v125, %v123
    %v154 = vpack.c.b16 %v126, %v124
    %v155 = vpack.c.b16 %v129, %v127
    %v156 = vpack.c.b16 %v130, %v128
    %v157 = vpack.c.b16 %v133, %v131
    %v158 = vpack.c.b16 %v134, %v132
    %v159 = vpack.c.b16 %v137, %v135
    %v160 = vpack.c.b16 %v138, %v136
    %v161 = vpack.c.b16 %v141, %v139
    %v162 = vpack.c.b16 %v142, %v140
    %v163 = vpack.c.b16 %v145, %v143
    %v164 = vpack.c.b16 %v146, %v144
    %v165 = vpack.c.b16 %v149, %v147
    %v166 = vpack.c.b16 %v150, %v148
    %183 = vmatprep.subr.bf16.mxu0 %v152
    %184 = vmatpush1.bf16.msra.mxu0 %v151
    %185 = vmatprep.subr.bf16.mxu0 %v154
    %186 = vmatpush1.bf16.msra.mxu0 %v153
    %187 = vmatprep.subr.bf16.mxu0 %v156
    %188 = vmatpush1.bf16.msra.mxu0 %v155
    %189 = vmatprep.subr.bf16.mxu0 %v158
    %190 = vmatpush1.bf16.msra.mxu0 %v157
    %191 = vmatprep.subr.bf16.mxu0 %v160
    %192 = vmatpush1.bf16.msra.mxu0 %v159
    %193 = vmatprep.subr.bf16.mxu0 %v162
    %194 = vmatpush1.bf16.msra.mxu0 %v161
    %195 = vmatprep.subr.bf16.mxu0 %v164
    %196 = vmatpush1.bf16.msra.mxu0 %v163
    %197 = vmatprep.subr.bf16.mxu0 %v166
    %198 = vmatpush1.bf16.msra.mxu0 %v165
    %199 = vmatprep.subr.bf16.mxu0 0
    %200 = vmatpush1.bf16.msra.mxu0 0
    %201 = vmatprep.subr.bf16.mxu0 0
    %202 = vmatpush1.bf16.msra.mxu0 0
    %203 = vmatprep.subr.bf16.mxu0 0
    %204 = vmatpush1.bf16.msra.mxu0 0
    %205 = vmatprep.subr.bf16.mxu0 0
    %206 = vmatpush1.bf16.msra.mxu0 0
    %207 = vmatprep.subr.bf16.mxu0 0
    %208 = vmatpush1.bf16.msra.mxu0 0
    %209 = vmatprep.subr.bf16.mxu0 0
    %210 = vmatpush1.bf16.msra.mxu0 0
    %211 = vmatprep.subr.bf16.mxu0 0
    %212 = vmatpush1.bf16.msra.mxu0 0
    %213 = vmatprep.subr.bf16.mxu0 0
    %214 = vmatpush1.bf16.msra.mxu0 0
    %215 = vmatprep.mubr.bf16.mxu0 0
    %216 = vmatmul.mubr.bf16.gmra.mrb[0].mxu0 %v73
    %v217 = vpop.f32.mrb[0].mxu0
    %v218 = vadd.f32 %v96, %v217
    %v219 = vpop.f32.mrb[0].mxu0
    %v220 = vadd.f32 %v100, %v219
    %v221 = vpop.f32.mrb[0].mxu0
    %v222 = vadd.f32 %v96, %v221
    %v223 = vpop.f32.mrb[0].mxu0
    %v224 = vadd.f32 %v100, %v223
    %225 = vmatprep.mubr.bf16.mxu0 0
    %226 = vmatmul.mubr.bf16.gmra.mrb[0].mxu0 %v74
    %v227 = vpop.f32.mrb[0].mxu0
    %v228 = vadd.f32 %v96, %v227
    %v229 = vpop.f32.mrb[0].mxu0
    %v230 = vadd.f32 %v100, %v229
    %v231 = vpop.f32.mrb[0].mxu0
    %v232 = vadd.f32 %v96, %v231
    %v233 = vpop.f32.mrb[0].mxu0
    %v234 = vadd.f32 %v100, %v233
    %235 = vdwg.mxu0
    %v236 = vmax.f32 %v218, 0.0
    %v237 = vmax.f32 %v220, 0.0
    %v238 = vmax.f32 %v222, 0.0
    %v239 = vmax.f32 %v224, 0.0
    %v240 = vmax.f32 %v228, 0.0
    %v241 = vmax.f32 %v230, 0.0
    %v242 = vmax.f32 %v232, 0.0
    %v243 = vmax.f32 %v234, 0.0
    %v244 = vpack.c.bf16 %v238, %v236
    %v245 = vpack.c.bf16 %v239, %v237
    %v246 = vpack.c.bf16 %v242, %v240
    %v247 = vpack.c.bf16 %v243, %v241
    %v248 = vld [vmem:[#allocation7] sm:$0xf]
    %v249 = vld [vmem:[#allocation7 + $0x4] sm:$0xf]
    %v250 = vld [vmem:[#allocation7 + $0x8] sm:$0xf]
    %v251 = vld [vmem:[#allocation7 + $0xc] sm:$0xf]
    %v252 = vld [vmem:[#allocation7 + $0x10] sm:$0xf]
    %v253 = vld [vmem:[#allocation7 + $0x14] sm:$0xf]
    %v254 = vld [vmem:[#allocation7 + $0x18] sm:$0xf]
    %v255 = vld [vmem:[#allocation7 + $0x1c] sm:$0xf]
    %v256 = vld [vmem:[#allocation7 + $0x20] sm:$0xf]
    %v257 = vld [vmem:[#allocation7 + $0x24] sm:$0xf]
    %v258 = vld [vmem:[#allocation7 + $0x28] sm:$0xf]
    %v259 = vld [vmem:[#allocation7 + $0x2c] sm:$0xf]
    %v260 = vld [vmem:[#allocation7 + $0x30] sm:$0xf]
    %v261 = vld [vmem:[#allocation7 + $0x34] sm:$0xf]
    %v262 = vld [vmem:[#allocation7 + $0x38] sm:$0xf]
    %v263 = vld [vmem:[#allocation7 + $0x3c] sm:$0xf]
    %v264 = vld [vmem:[#allocation7 + $0x40] sm:$0xf]
    %v265 = vld [vmem:[#allocation7 + $0x44] sm:$0xf]
    %v266 = vld [vmem:[#allocation7 + $0x48] sm:$0xf]
    %v267 = vld [vmem:[#allocation7 + $0x4c] sm:$0xf]
    %v268 = vld [vmem:[#allocation7 + $0x50] sm:$0xf]
    %v269 = vld [vmem:[#allocation7 + $0x54] sm:$0xf]
    %v270 = vld [vmem:[#allocation7 + $0x58] sm:$0xf]
    %v271 = vld [vmem:[#allocation7 + $0x5c] sm:$0xf]
    %v272 = vld [vmem:[#allocation7 + $0x60] sm:$0xf]
    %v273 = vld [vmem:[#allocation7 + $0x64] sm:$0xf]
    %v274 = vld [vmem:[#allocation7 + $0x68] sm:$0xf]
    %v275 = vld [vmem:[#allocation7 + $0x6c] sm:$0xf]
    %v276 = vld [vmem:[#allocation7 + $0x70] sm:$0xf]
    %v277 = vld [vmem:[#allocation7 + $0x74] sm:$0xf]
    %v278 = vld [vmem:[#allocation7 + $0x78] sm:$0xf]
    %v279 = vld [vmem:[#allocation7 + $0x7c] sm:$0xf]
    %v280 = vld [vmem:[%s6] sm:$0x1]
    %v282 = vlaneseq
    %v283 = vshrl.u32 %v282, 7
    %v284 = vsub.s32 0, %v283
    %v285 = vrot.slane %v280, %v284
    %v319 = vunpack.c.l.b16 %v248
    %v320 = vunpack.c.l.b16 %v249
    %v321 = vunpack.c.l.b16 %v250
    %v322 = vunpack.c.l.b16 %v251
    %v323 = vunpack.c.l.b16 %v252
    %v324 = vunpack.c.l.b16 %v253
    %v325 = vunpack.c.l.b16 %v254
    %v326 = vunpack.c.l.b16 %v255
    %v327 = vunpack.c.l.b16 %v256
    %v328 = vunpack.c.l.b16 %v257
    %v329 = vunpack.c.l.b16 %v258
    %v330 = vunpack.c.l.b16 %v259
    %v331 = vunpack.c.l.b16 %v260
    %v332 = vunpack.c.l.b16 %v261
    %v333 = vunpack.c.l.b16 %v262
    %v334 = vunpack.c.l.b16 %v263
    %v335 = vunpack.c.l.b16 %v264
    %v336 = vunpack.c.l.b16 %v265
    %v337 = vunpack.c.l.b16 %v266
    %v338 = vunpack.c.l.b16 %v267
    %v339 = vunpack.c.l.b16 %v268
    %v340 = vunpack.c.l.b16 %v269
    %v341 = vunpack.c.l.b16 %v270
    %v342 = vunpack.c.l.b16 %v271
    %v343 = vunpack.c.l.b16 %v272
    %v344 = vunpack.c.l.b16 %v273
    %v345 = vunpack.c.l.b16 %v274
    %v346 = vunpack.c.l.b16 %v275
    %v347 = vunpack.c.l.b16 %v276
    %v348 = vunpack.c.l.b16 %v277
    %v349 = vunpack.c.l.b16 %v278
    %v350 = vunpack.c.l.b16 %v279
    %v351 = vpack.c.b16 %v320, %v319
    %v352 = vpack.c.b16 %v322, %v321
    %v353 = vpack.c.b16 %v324, %v323
    %v354 = vpack.c.b16 %v326, %v325
    %v355 = vpack.c.b16 %v328, %v327
    %v356 = vpack.c.b16 %v330, %v329
    %v357 = vpack.c.b16 %v332, %v331
    %v358 = vpack.c.b16 %v334, %v333
    %v359 = vpack.c.b16 %v336, %v335
    %v360 = vpack.c.b16 %v338, %v337
    %v361 = vpack.c.b16 %v340, %v339
    %v362 = vpack.c.b16 %v342, %v341
    %v363 = vpack.c.b16 %v344, %v343
    %v364 = vpack.c.b16 %v346, %v345
    %v365 = vpack.c.b16 %v348, %v347
    %v366 = vpack.c.b16 %v350, %v349
    %383 = vmatprep.subr.bf16.mxu0 0
    %384 = vmatpush1.bf16.msra.mxu0 %v351
    %385 = vmatprep.subr.bf16.mxu0 0
    %386 = vmatpush1.bf16.msra.mxu0 %v352
    %387 = vmatprep.subr.bf16.mxu0 0
    %388 = vmatpush1.bf16.msra.mxu0 %v353
    %389 = vmatprep.subr.bf16.mxu0 0
    %390 = vmatpush1.bf16.msra.mxu0 %v354
    %391 = vmatprep.subr.bf16.mxu0 0
    %392 = vmatpush1.bf16.msra.mxu0 %v355
    %393 = vmatprep.subr.bf16.mxu0 0
    %394 = vmatpush1.bf16.msra.mxu0 %v356
    %395 = vmatprep.subr.bf16.mxu0 0
    %396 = vmatpush1.bf16.msra.mxu0 %v357
    %397 = vmatprep.subr.bf16.mxu0 0
    %398 = vmatpush1.bf16.msra.mxu0 %v358
    %399 = vmatprep.subr.bf16.mxu0 0
    %400 = vmatpush1.bf16.msra.mxu0 %v359
    %401 = vmatprep.subr.bf16.mxu0 0
    %402 = vmatpush1.bf16.msra.mxu0 %v360
    %403 = vmatprep.subr.bf16.mxu0 0
    %404 = vmatpush1.bf16.msra.mxu0 %v361
    %405 = vmatprep.subr.bf16.mxu0 0
    %406 = vmatpush1.bf16.msra.mxu0 %v362
    %407 = vmatprep.subr.bf16.mxu0 0
    %408 = vmatpush1.bf16.msra.mxu0 %v363
    %409 = vmatprep.subr.bf16.mxu0 0
    %410 = vmatpush1.bf16.msra.mxu0 %v364
    %411 = vmatprep.subr.bf16.mxu0 0
    %412 = vmatpush1.bf16.msra.mxu0 %v365
    %413 = vmatprep.subr.bf16.mxu0 0
    %414 = vmatpush1.bf16.msra.mxu0 %v366
    %415 = vmatprep.mubr.bf16.mxu0 %v245
    %416 = vmatmul.mubr.bf16.gmra.mrb[0].mxu0 %v244
    %v417 = vpop.f32.mrb[0].mxu0
    %v418 = vadd.f32 %v285, %v417
    %v419 = vpop.f32.mrb[0].mxu0
    %v420 = vpop.f32.mrb[0].mxu0
    %v421 = vadd.f32 %v285, %v420
    %v422 = vpop.f32.mrb[0].mxu0
    %423 = vmatprep.mubr.bf16.mxu0 %v247
    %424 = vmatmul.mubr.bf16.gmra.mrb[0].mxu0 %v246
    %v425 = vpop.f32.mrb[0].mxu0
    %v426 = vadd.f32 %v285, %v425
    %v427 = vpop.f32.mrb[0].mxu0
    %v428 = vpop.f32.mrb[0].mxu0
    %v429 = vadd.f32 %v285, %v428
    %v430 = vpop.f32.mrb[0].mxu0
    %431 = vdwg.mxu0
    %v432 = vadd.f32 %v418, %v69
    %v433 = vadd.f32 %v421, %v70
    %v434 = vadd.f32 %v426, %v71
    %v435 = vadd.f32 %v429, %v72
    %v436 = vld [vmem:[%s1] sm:$0x1]
    %v437 = vld [vmem:[%s2] sm:$0x1]
    %438 = vadd.xlane.f32.xlu0 %v432
    %v439 = vpop.xlane.xlu0 %438
    %440 = vadd.xlane.f32.xlu0 %v433
    %v441 = vpop.xlane.xlu0 %440
    %442 = vadd.xlane.f32.xlu0 %v434
    %v443 = vpop.xlane.xlu0 %442
    %444 = vadd.xlane.f32.xlu0 %v435
    %v445 = vpop.xlane.xlu0 %444
    %v446 = vrcp.pop 128.0
    %v447 = vmul.f32 %v439, %v446
    %v448 = vmul.f32 %v441, %v446
    %v449 = vmul.f32 %v443, %v446
    %v450 = vmul.f32 %v445, %v446
    %v451 = vsub.f32 %v432, %v447
    %v452 = vsub.f32 %v433, %v448
    %v453 = vsub.f32 %v434, %v449
    %v454 = vsub.f32 %v435, %v450
    %v455 = vmul.f32 %v451, %v451
    %v456 = vmul.f32 %v452, %v452
    %v457 = vmul.f32 %v453, %v453
    %v458 = vmul.f32 %v454, %v454
    %459 = vadd.xlane.f32.xlu0 %v455
    %v460 = vpop.xlane.xlu0 %459
    %461 = vadd.xlane.f32.xlu0 %v456
    %v462 = vpop.xlane.xlu0 %461
    %463 = vadd.xlane.f32.xlu0 %v457
    %v464 = vpop.xlane.xlu0 %463
    %465 = vadd.xlane.f32.xlu0 %v458
    %v466 = vpop.xlane.xlu0 %465
    %v467 = vmul.f32 %v460, %v446
    %v468 = vmul.f32 %v462, %v446
    %v469 = vmul.f32 %v464, %v446
    %v470 = vmul.f32 %v466, %v446
    %v471 = vadd.f32 %v467, 1e-06
    %v472 = vadd.f32 %v468, 1e-06
    %v473 = vadd.f32 %v469, 1e-06
    %v474 = vadd.f32 %v470, 1e-06
    %v475 = vrsqrt.pop %v471
    %v476 = vrsqrt.pop %v472
    %v477 = vrsqrt.pop %v473
    %v478 = vrsqrt.pop %v474
    %v479 = vmul.f32 %v451, %v475
    %v480 = vmul.f32 %v452, %v476
    %v481 = vmul.f32 %v453, %v477
    %v482 = vmul.f32 %v454, %v478
    %v484 = vlaneseq
    %v485 = vshrl.u32 %v484, 7
    %v486 = vsub.s32 0, %v485
    %v487 = vrot.slane %v436, %v486
    %v489 = vmul.f32 %v479, %v487
    %v490 = vmul.f32 %v480, %v487
    %v491 = vmul.f32 %v481, %v487
    %v492 = vmul.f32 %v482, %v487
    %v494 = vlaneseq
    %v495 = vshrl.u32 %v494, 7
    %v496 = vsub.s32 0, %v495
    %v497 = vrot.slane %v437, %v496
    %v499 = vadd.f32 %v489, %v497
    %v500 = vadd.f32 %v490, %v497
    %v501 = vadd.f32 %v491, %v497
    %v502 = vadd.f32 %v492, %v497
    %503 = vst [vmem:[#allocation8] sm:$0xff] %v499
    %504 = vst [vmem:[#allocation8 + $0x8] sm:$0xff] %v500
    %505 = vst [vmem:[#allocation8 + $0x10] sm:$0xff] %v501
    %506 = vst [vmem:[#allocation8 + $0x18] sm:$0xff] %v502
    // Predicated region
    $region42: #{tpu_custom_call.1} parent=1 // pred_check
      _
    $region43: #{tpu_custom_call.1} parent=1 // pred_check_branch
      %508 = sbr.rel (0) target = $region45
    $region44: #{tpu_custom_call.1} parent=1 // pred_region
      %s510 = ssub.s32 512, 512
      %511 = vsyncadd [#allocation4], %s510
      %s512 = sshll.u32 [#allocation8], 4
      %s513 = int_to_ptr.vmem [resolvable:$true] %s512
      %518 = dma.vmem_to_hbm [thread:$0]  %s513, 512, %s7, [#allocation4], 128, 128, 8
    $region45: #{tpu_custom_call.1} parent=1 // pred_fallthru
      _
    // Predicated region
    $region46: #{tpu_custom_call.1} parent=1 // pred_check
      _
    $region47: #{tpu_custom_call.1} parent=1 // pred_check_branch
      %520 = sbr.rel (0) target = $region49
    $region48: #{tpu_custom_call.1} parent=1 // pred_region
      %521 = dma.done [#allocation4], 512
    $region49: #{tpu_custom_call.1} parent=1 // pred_fallthru
      _
    %522 = vsyncpa [#allocation3], 1
    %523 = vsyncpa [#allocation6], 1
    %524 = vsyncpa [#allocation4], 1

</llo_original>
